<compile_context>
chip_gen: v5e
topology: v5e:2x2
jax: 0.10.0
libtpu: 0.0.40
codegen_flags: <defaults>
</compile_context>

<pallas_src>
import functools

import jax
import jax.numpy as jnp
from jax.experimental import pallas as pl
from jax.experimental.pallas import tpu as pltpu

ALPHA = 5.0
GAMMA = 1.0  # gamma == 1 -> the pow in the reference formula is the identity
LANES = 128


def _focal_loss_kernel(x_ref, t_ref, o_ref, *, n_valid, row_tile, needs_mask):
    x = x_ref[...].astype(jnp.float32)
    t = t_ref[...].astype(jnp.float32)

    # BCEWithLogitsLoss(reduction='none'), numerically stable form:
    #   bce = max(x, 0) - x * t + log1p(exp(-|x|))
    bce = jnp.maximum(x, 0.0) - x * t + jnp.log1p(jnp.exp(-jnp.abs(x)))
    pt = jnp.exp(-bce)
    # gamma == 1.0: skip the float-exponent pow (would add EUP transcendentals).
    f_loss = ALPHA * (1.0 - pt) * bce

    if needs_mask:
        # Zero out contributions from the zero-padded tail elements.  Only the last
        # grid block actually contains padding, but this branchless VPU mask is free
        # in an HBM-bound kernel.
        i = pl.program_id(0)
        row = jax.lax.broadcasted_iota(jnp.int32, (row_tile, LANES), 0)
        lane = jax.lax.broadcasted_iota(jnp.int32, (row_tile, LANES), 1)
        gidx = (i * row_tile + row) * LANES + lane
        f_loss = jnp.where(gidx < n_valid, f_loss, 0.0)

    # Per-block partial sum kept as a single (8,128) vreg: the reduction over the
    # middle axis is pure VPU elementwise adds (no per-step XLU / SMEM scalar RMW),
    # and the output store stays lane-dense (unmasked vst).
    partial = f_loss.reshape(1, row_tile // 8, 8, LANES).sum(axis=1)  # (1, 8, 128)
    o_ref[...] = partial


def focal_loss(inputs, targets, *, row_tile=4096):
    assert inputs.shape == targets.shape
    n = inputs.size
    assert n > 0

    rows = pl.cdiv(n, LANES)
    rows8 = ((rows + 7) // 8) * 8                 # sublane dim must be multiple of 8
    tile = min(((row_tile + 7) // 8) * 8, rows8)  # tile rows, multiple of 8
    padded_rows = ((rows8 + tile - 1) // tile) * tile
    padded_n = padded_rows * LANES
    num_blocks = padded_rows // tile
    needs_mask = padded_n != n

    xf = inputs.reshape(-1)
    tf = targets.reshape(-1)
    if needs_mask:
        pad = padded_n - n
        xf = jnp.pad(xf, (0, pad))
        tf = jnp.pad(tf, (0, pad))
    x2d = xf.reshape(padded_rows, LANES)
    t2d = tf.reshape(padded_rows, LANES)

    kernel = functools.partial(
        _focal_loss_kernel, n_valid=n, row_tile=tile, needs_mask=needs_mask
    )

    partials = pl.pallas_call(
        kernel,
        out_shape=jax.ShapeDtypeStruct((num_blocks, 8, LANES), jnp.float32),
        grid_spec=pltpu.PrefetchScalarGridSpec(
            num_scalar_prefetch=0,
            grid=(num_blocks,),
            in_specs=[
                pl.BlockSpec((tile, LANES), lambda i: (i, 0)),
                pl.BlockSpec((tile, LANES), lambda i: (i, 0)),
            ],
            out_specs=pl.BlockSpec((1, 8, LANES), lambda i: (i, 0, 0)),
        ),
        compiler_params=pltpu.CompilerParams(
            # No carried state across grid steps -> both TensorCores usable on v7x.
            dimension_semantics=("parallel",),
        ),
    )(x2d, t2d)

    # Tiny final reduction over (num_blocks, 8, 128) partials; mean over true N.
    return jnp.sum(partials) / jnp.float32(n)


def focal_loss_ref(inputs, targets):
    x = inputs.astype(jnp.float32)
    t = targets.astype(jnp.float32)
    bce = jnp.maximum(x, 0.0) - x * t + jnp.log1p(jnp.exp(-jnp.abs(x)))
    pt = jnp.exp(-bce)
    return jnp.mean(ALPHA * (1.0 - pt) ** GAMMA * bce)


if __name__ == "__main__":
    key = jax.random.PRNGKey(0)

    # Test 1: NCHW logits/targets, element count divisible by 128 (no masking path).
    k1, k2, k3, k4 = jax.random.split(key, 4)
    shape = (2, 4, 16, 16)
    inputs = jax.random.normal(k1, shape, dtype=jnp.float32)
    targets = (jax.random.uniform(k2, shape) > 0.5).astype(jnp.float32)
    out = jax.block_until_ready(focal_loss(inputs, targets))
    ref = focal_loss_ref(inputs, targets)
    assert jnp.allclose(out, ref, rtol=1e-5, atol=1e-5), (out, ref)

    # Test 2: odd shape (exercises the padded / masked tail path).
    shape2 = (2, 3, 7, 5)
    inputs2 = jax.random.normal(k3, shape2, dtype=jnp.float32)
    targets2 = (jax.random.uniform(k4, shape2) > 0.5).astype(jnp.float32)
    out2 = jax.block_until_ready(focal_loss(inputs2, targets2))
    ref2 = focal_loss_ref(inputs2, targets2)
    assert jnp.allclose(out2, ref2, rtol=1e-5, atol=1e-5), (out2, ref2)

    print("KERNEL_OK")
</pallas_src>

<mosaic_0001>
module attributes {stable_mosaic.version = 11 : i64} {
  func.func @_focal_loss_kernel(%arg0: i32, %arg1: memref<16x128xf32, #tpu.memory_space<vmem>>, %arg2: memref<16x128xf32, #tpu.memory_space<vmem>>, %arg3: memref<1x8x128xf32, #tpu.memory_space<vmem>>) attributes {dimension_semantics = [#tpu.dimension_semantics<parallel>], iteration_bounds = array<i64: 1>, scalar_prefetch = 0 : i64, scratch_operands = 0 : i64, tpu.core_type = #tpu.core_type<tc>, window_params = [{transform_indices = @transform_0, window_bounds = array<i64: 16, 128>}, {transform_indices = @transform_1, window_bounds = array<i64: 16, 128>}, {transform_indices = @transform_2, window_bounds = array<i64: 1, 8, 128>}]} {
    %c0 = arith.constant 0 : index
    %c0_0 = arith.constant 0 : index
    %0 = vector.load %arg1[%c0, %c0_0] : memref<16x128xf32, #tpu.memory_space<vmem>>, vector<16x128xf32>
    %c0_1 = arith.constant 0 : index
    %c0_2 = arith.constant 0 : index
    %1 = vector.load %arg2[%c0_1, %c0_2] : memref<16x128xf32, #tpu.memory_space<vmem>>, vector<16x128xf32>
    %cst = arith.constant 0.000000e+00 : f32
    %2 = vector.broadcast %cst : f32 to vector<16x128xf32>
    %3 = arith.maximumf %0, %2 : vector<16x128xf32>
    %4 = arith.mulf %0, %1 : vector<16x128xf32>
    %5 = arith.subf %3, %4 : vector<16x128xf32>
    %6 = math.absf %0 : vector<16x128xf32>
    %cst_3 = arith.constant 0.000000e+00 : f32
    %7 = vector.broadcast %cst_3 : f32 to vector<16x128xf32>
    %8 = arith.subf %7, %6 : vector<16x128xf32>
    %9 = math.exp %8 : vector<16x128xf32>
    %10 = math.log1p %9 : vector<16x128xf32>
    %11 = arith.addf %5, %10 : vector<16x128xf32>
    %cst_4 = arith.constant 0.000000e+00 : f32
    %12 = vector.broadcast %cst_4 : f32 to vector<16x128xf32>
    %13 = arith.subf %12, %11 : vector<16x128xf32>
    %14 = math.exp %13 : vector<16x128xf32>
    %cst_5 = arith.constant 1.000000e+00 : f32
    %15 = vector.broadcast %cst_5 : f32 to vector<16x128xf32>
    %16 = arith.subf %15, %14 : vector<16x128xf32>
    %cst_6 = arith.constant 5.000000e+00 : f32
    %17 = vector.broadcast %cst_6 : f32 to vector<16x128xf32>
    %18 = arith.mulf %17, %16 : vector<16x128xf32>
    %19 = arith.mulf %18, %11 : vector<16x128xf32>
    %20 = vector.shape_cast %19 : vector<16x128xf32> to vector<1x2x8x128xf32>
    %cst_7 = arith.constant dense<0.000000e+00> : vector<1x8x128xf32>
    %21 = vector.multi_reduction <add>, %20, %cst_7 [1] : vector<1x2x8x128xf32> to vector<1x8x128xf32>
    %c0_8 = arith.constant 0 : index
    %c0_9 = arith.constant 0 : index
    %c0_10 = arith.constant 0 : index
    %22 = vector.load %arg3[%c0_8, %c0_9, %c0_10] : memref<1x8x128xf32, #tpu.memory_space<vmem>>, vector<1x8x128xf32>
    tpu.vector_store %arg3[%c0_8, %c0_9, %c0_10], %21 {strides = array<i32>} : memref<1x8x128xf32, #tpu.memory_space<vmem>>, vector<1x8x128xf32>,
    return
  }
  func.func @transform_0(%arg0: i32) -> (i32, i32) {
    %c0_i32 = arith.constant 0 : i32
    %c0_i32_0 = arith.constant 0 : i32
    return %arg0, %c0_i32 : i32, i32
  }
  func.func @transform_1(%arg0: i32) -> (i32, i32) {
    %c0_i32 = arith.constant 0 : i32
    %c0_i32_0 = arith.constant 0 : i32
    return %arg0, %c0_i32 : i32, i32
  }
  func.func @transform_2(%arg0: i32) -> (i32, i32, i32) {
    %c0_i32 = arith.constant 0 : i32
    %c0_i32_0 = arith.constant 0 : i32
    %c0_i32_1 = arith.constant 0 : i32
    return %arg0, %c0_i32, %c0_i32_0 : i32, i32, i32
  }
}

</mosaic_0001>

<llo_original>
// kernel: tpu_custom_call.1
$region0: #{tpu_custom_call.1}
  #allocation0 [shape = 'u32[]', space=smem, size = 0x4, offset = 0x4, fixed_abs, tag = 'smem constant byte address 0x4 - core index']
  #allocation1 [shape = 'u32[72,128]{1,0:T(1,128)}', space=vmem, size = 0x9000, scoped, tag = 'internal scratch']
  %s0 = inlined_call_operand.hbm [shape: f32[16,128], index: 0, kind: input, shape index: {}]
  %s1 = inlined_call_operand.hbm [shape: f32[16,128], index: 1, kind: input, shape index: {}]
  %s2 = inlined_call_operand.hbm [shape: f32[1,8,128], index: 2, kind: output, shape index: {}]
  %s3 = sld [smem:[#allocation0]]
  $region26: #{tpu_custom_call.1} parent=0
    _
  %s5 = ssub.s32 1, %s3
  %s6 = scalar_select 0, %s5, %s3
  $region1: #{tpu_custom_call.1} parent=0
    #allocation2 [shape = 'u8[8192]{0}', space=vmem, size = 0x2000, scoped, tag = 'input window, operand 0, single buffered']
    #allocation3 [shape = 's32[1]{0}', space=sflag, size = 0x4, scoped, tag = 'scoped memory for tpu_custom_call.1']
    #allocation4 [shape = 's32[1]{0}', space=sflag, size = 0x4, scoped, tag = 'scoped memory for tpu_custom_call.1']
    #allocation5 [shape = 'u8[8192]{0}', space=vmem, size = 0x2000, scoped, tag = 'input window, operand 1, single buffered']
    #allocation6 [shape = 's32[1]{0}', space=sflag, size = 0x4, scoped, tag = 'scoped memory for tpu_custom_call.1']
    #allocation7 [shape = 'u8[4096]{0}', space=vmem, size = 0x1000, scoped, tag = 'output window, operand 0, single buffered']
    %7 = vsyncpa [#allocation3], 0
    %8 = vsyncpa [#allocation6], 0
    %9 = vsyncpa [#allocation4], 0
    // Predicated region
    $region2: #{tpu_custom_call.1} parent=1 // pred_check
      _
    $region3: #{tpu_custom_call.1} parent=1 // pred_check_branch
      %11 = sbr.rel (0) target = $region5
    $region4: #{tpu_custom_call.1} parent=1 // pred_region
      %13 = vsyncadd [#allocation3], 0
      %s14 = sshll.u32 %s0, 4
      %s15 = int_to_ptr.hbm [resolvable:$true] %s14
      %s16 = sshll.u32 [#allocation2], 4
      %s17 = int_to_ptr.vmem [resolvable:$true] %s16
      %22 = dma.hbm_to_vmem [thread:$0]  %s15, 256, %s17, [#allocation3], 128, 128, 8
    $region5: #{tpu_custom_call.1} parent=1 // pred_fallthru
      _
    // Predicated region
    $region6: #{tpu_custom_call.1} parent=1 // pred_check
      _
    $region7: #{tpu_custom_call.1} parent=1 // pred_check_branch
      %24 = sbr.rel (0) target = $region9
    $region8: #{tpu_custom_call.1} parent=1 // pred_region
      %26 = vsyncadd [#allocation6], 0
      %s27 = sshll.u32 %s1, 4
      %s28 = int_to_ptr.hbm [resolvable:$true] %s27
      %s29 = sshll.u32 [#allocation5], 4
      %s30 = int_to_ptr.vmem [resolvable:$true] %s29
      %35 = dma.hbm_to_vmem [thread:$0]  %s28, 256, %s30, [#allocation6], 128, 128, 8
    $region9: #{tpu_custom_call.1} parent=1 // pred_fallthru
      _
    // Predicated region
    $region10: #{tpu_custom_call.1} parent=1 // pred_check
      _
    $region11: #{tpu_custom_call.1} parent=1 // pred_check_branch
      %37 = sbr.rel (0) target = $region13
    $region12: #{tpu_custom_call.1} parent=1 // pred_region
      %39 = dma.done [#allocation3], 256
    $region13: #{tpu_custom_call.1} parent=1 // pred_fallthru
      _
    // Predicated region
    $region14: #{tpu_custom_call.1} parent=1 // pred_check
      _
    $region15: #{tpu_custom_call.1} parent=1 // pred_check_branch
      %41 = sbr.rel (0) target = $region17
    $region16: #{tpu_custom_call.1} parent=1 // pred_region
      %43 = dma.done [#allocation6], 256
    $region17: #{tpu_custom_call.1} parent=1 // pred_fallthru
      _
    %v44 = vld [vmem:[#allocation2] sm:$0xff]
    %v45 = vld [vmem:[#allocation2 + $0x8] sm:$0xff]
    %v46 = vld [vmem:[#allocation5] sm:$0xff]
    %v47 = vld [vmem:[#allocation5 + $0x8] sm:$0xff]
    %v48 = vmax.f32 %v44, 0.0
    %v49 = vmax.f32 %v45, 0.0
    %v50 = vmul.f32 %v44, %v46
    %v51 = vmul.f32 %v45, %v47
    %v52 = vsub.f32 %v48, %v50
    %v53 = vsub.f32 %v49, %v51
    %v54 = vand.u32 2147483647, %v44
    %v55 = vand.u32 2147483647, %v45
    %v56 = vsub.f32 0.0, %v54
    %v57 = vsub.f32 0.0, %v55
    %v58 = vmul.f32 %v56, 1.442695
    %v59 = vpow.pop %v58
    %v60 = vmul.f32 %v57, 1.442695
    %v61 = vpow.pop %v60
    %v62 = vadd.f32 %v59, 1.0
    %v63 = vlog2.pop %v62
    %v64 = vmul.f32 %v63, 0.6931472
    %v65 = vmul.f32 -0.5, %v59
    %v66 = vadd.f32 %v65, 1.0
    %v67 = vmul.f32 %v66, %v59
    %v68 = vand.u32 2147483647, %v59
    %vm69 = vcmp.lt.f32.partialorder %v68, 0.0004427343
    %v70 = vsel %vm69, %v67, %v64
    %v71 = vadd.f32 %v61, 1.0
    %v72 = vlog2.pop %v71
    %v73 = vmul.f32 %v72, 0.6931472
    %v74 = vmul.f32 -0.5, %v61
    %v75 = vadd.f32 %v74, 1.0
    %v76 = vmul.f32 %v75, %v61
    %v77 = vand.u32 2147483647, %v61
    %vm78 = vcmp.lt.f32.partialorder %v77, 0.0004427343
    %v79 = vsel %vm78, %v76, %v73
    %v80 = vadd.f32 %v52, %v70
    %v81 = vadd.f32 %v53, %v79
    %v82 = vsub.f32 0.0, %v80
    %v83 = vsub.f32 0.0, %v81
    %v84 = vmul.f32 %v82, 1.442695
    %v85 = vpow.pop %v84
    %v86 = vmul.f32 %v83, 1.442695
    %v87 = vpow.pop %v86
    %v88 = vsub.f32 1.0, %v85
    %v89 = vsub.f32 1.0, %v87
    %v90 = vmul.f32 %v88, 5.0
    %v91 = vmul.f32 %v89, 5.0
    %v92 = vmul.f32 %v90, %v80
    %v93 = vmul.f32 %v91, %v81
    %v94 = vadd.f32 %v92, %v93
    %95 = vst [vmem:[#allocation7] sm:$0xff] %v94
    // Predicated region
    $region18: #{tpu_custom_call.1} parent=1 // pred_check
      _
    $region19: #{tpu_custom_call.1} parent=1 // pred_check_branch
      %97 = sbr.rel (0) target = $region21
    $region20: #{tpu_custom_call.1} parent=1 // pred_region
      %99 = vsyncadd [#allocation4], 0
      %s101 = sshll.u32 [#allocation7], 4
      %s102 = int_to_ptr.vmem [resolvable:$true] %s101
      %s103 = sshll.u32 %s2, 4
      %s104 = int_to_ptr.hbm [resolvable:$true] %s103
      %106 = dma.vmem_to_hbm [thread:$0]  %s102, 128, %s104, [#allocation4]
    $region21: #{tpu_custom_call.1} parent=1 // pred_fallthru
      _
    // Predicated region
    $region22: #{tpu_custom_call.1} parent=1 // pred_check
      _
    $region23: #{tpu_custom_call.1} parent=1 // pred_check_branch
      %108 = sbr.rel (0) target = $region25
    $region24: #{tpu_custom_call.1} parent=1 // pred_region
      %110 = dma.done [#allocation4], 128
    $region25: #{tpu_custom_call.1} parent=1 // pred_fallthru
      _
    %111 = vsyncpa [#allocation3], 1
    %112 = vsyncpa [#allocation6], 1
    %113 = vsyncpa [#allocation4], 1

</llo_original>
